<compile_context>
chip_gen: v7x
topology: tpu7x:2x2x1
jax: 0.10.0
libtpu: 0.0.40
codegen_flags: <defaults>
</compile_context>

<pallas_src>
import functools

import jax
import jax.numpy as jnp
from jax.experimental import pallas as pl
from jax.experimental.pallas import tpu as pltpu


def _round_up(x, m):
    return (x + m - 1) // m * m


def _patch_embed_kernel(x_ref, w_ref, b_ref, o_ref):
    # x_ref: (TM, K) bf16 | w_ref: (K, E_pad) bf16 | b_ref: (1, E_pad) f32
    # o_ref: (TM, E_pad) out dtype.  K is contracted inside one block on the MXU.
    acc = jnp.dot(x_ref[...], w_ref[...], preferred_element_type=jnp.float32)
    o_ref[...] = (acc + b_ref[...]).astype(o_ref.dtype)


@functools.partial(jax.jit, static_argnames=("patch_size", "tm"))
def patch_embed(x_nchw, weight, bias, patch_size, tm=1024):
    """x_nchw: (B, C, H, W); weight: (E, C, p, p); bias: (E,). Returns (B, N, E)."""
    B, C, H, W = x_nchw.shape
    E = weight.shape[0]
    p = patch_size
    Hp, Wp = H // p, W // p
    N = Hp * Wp
    M = B * N
    K = C * p * p
    out_dtype = x_nchw.dtype

    # ---- wrapper glue (plain JAX) -------------------------------------------
    # Cast to bf16 *before* the patch relayout: the MXU wants bf16 operands
    # anyway, and this halves the HBM traffic of the relayout pass.
    x_bf16 = x_nchw.astype(jnp.bfloat16)
    # TODO(synk): fuse this im2col relayout into the kernel (in-kernel XLU
    # transpose of an NCHW block) to save one extra HBM round-trip of the
    # activation at large shapes; the Mosaic-unfriendly
    # (tH, Wp, C, p, p) -> (tH*Wp, K) collapse is the blocker.
    patches = x_bf16.reshape(B, C, Hp, p, Wp, p)
    patches = patches.transpose(0, 2, 4, 1, 3, 5)       # (B, Hp, Wp, C, p, p)
    patches = patches.reshape(M, K)                      # (M, K), K = (c, ph, pw)

    # Conv2d weight (E, C, p, p) -> (K, E), K ordered (c, ph, pw). Tiny tensor.
    w_mat = weight.reshape(E, K).T.astype(jnp.bfloat16)
    b_mat = bias.reshape(1, E).astype(jnp.float32)

    # ---- TPU-friendly padding / tiling --------------------------------------
    tm_eff = min(tm, _round_up(M, 16))     # bf16 sublane packing => 16-row tiles
    M_pad = _round_up(M, tm_eff)
    E_pad = _round_up(E, 128)              # lane-dense output stores

    if M_pad != M:
        patches = jnp.pad(patches, ((0, M_pad - M), (0, 0)))
    if E_pad != E:
        w_mat = jnp.pad(w_mat, ((0, 0), (0, E_pad - E)))
        b_mat = jnp.pad(b_mat, ((0, 0), (0, E_pad - E)))

    out_bytes = jnp.dtype(out_dtype).itemsize
    cost = pl.CostEstimate(
        flops=2 * M_pad * K * E_pad,
        transcendentals=0,
        bytes_accessed=(M_pad * K * 2 + K * E_pad * 2 + E_pad * 4
                        + M_pad * E_pad * out_bytes),
    )

    out = pl.pallas_call(
        _patch_embed_kernel,
        out_shape=jax.ShapeDtypeStruct((M_pad, E_pad), out_dtype),
        grid_spec=pl.GridSpec(
            grid=(M_pad // tm_eff,),
            in_specs=[
                pl.BlockSpec((tm_eff, K), lambda i: (i, 0)),   # streamed x tile
                pl.BlockSpec((K, E_pad), lambda i: (0, 0)),    # VMEM-resident W
                pl.BlockSpec((1, E_pad), lambda i: (0, 0)),    # VMEM-resident bias
            ],
            out_specs=pl.BlockSpec((tm_eff, E_pad), lambda i: (i, 0)),
        ),
        compiler_params=pltpu.CompilerParams(
            dimension_semantics=("parallel",),     # M tiles independent -> v7x 2-TC
            vmem_limit_bytes=48 * 1024 * 1024,     # v5e default scoped VMEM is ~16 MiB
        ),
        cost_estimate=cost,
    )(patches, w_mat, b_mat)

    return out[:M, :E].reshape(B, N, E)


def reference_patch_embed(x_nchw, weight, bias, patch_size):
    """Pure-JAX reference identical to PyTorch Conv2d(stride=kernel)+flatten+transpose."""
    y = jax.lax.conv_general_dilated(
        x_nchw, weight,
        window_strides=(patch_size, patch_size),
        padding="VALID",
        dimension_numbers=("NCHW", "OIHW", "NCHW"),
    ) + bias[None, :, None, None]
    B, E, Hp, Wp = y.shape
    return y.reshape(B, E, Hp * Wp).transpose(0, 2, 1)


if __name__ == "__main__":
    # Small shapes consistent with the module: 16x16 input, patch 8, 4 chans, 32-dim embed.
    B, C, H, W = 2, 4, 16, 16
    patch_size = 8
    embed_dim = 32

    key = jax.random.PRNGKey(0)
    kx, kw, kb = jax.random.split(key, 3)
    x = jax.random.normal(kx, (B, C, H, W), dtype=jnp.float32)
    # Deterministic synthetic params; shapes from nn.Conv2d(in_chans, embed_dim, p, p).
    weight = jax.random.normal(kw, (embed_dim, C, patch_size, patch_size),
                               dtype=jnp.float32) * 0.02
    bias = jax.random.normal(kb, (embed_dim,), dtype=jnp.float32) * 0.02

    out = patch_embed(x, weight, bias, patch_size=patch_size)
    out = jax.block_until_ready(out)

    ref = reference_patch_embed(x, weight, bias, patch_size)
    N = (H // patch_size) * (W // patch_size)
    assert out.shape == (B, N, embed_dim)
    # bf16 MXU operands with f32 accumulation -> loosen tolerance vs f32 reference.
    assert jnp.allclose(out, ref, atol=2e-2, rtol=2e-2), "mismatch vs reference"

    print("KERNEL_OK")
</pallas_src>

<mosaic_0001>
module attributes {stable_mosaic.version = 11 : i64} {
  func.func @_patch_embed_kernel(%arg0: i32, %arg1: memref<16x256xbf16, #tpu.memory_space<vmem>>, %arg2: memref<256x128xbf16, #tpu.memory_space<vmem>>, %arg3: memref<1x128xf32, #tpu.memory_space<vmem>>, %arg4: memref<16x128xf32, #tpu.memory_space<vmem>>) attributes {dimension_semantics = [#tpu.dimension_semantics<parallel>], iteration_bounds = array<i64: 1>, scalar_prefetch = 0 : i64, scratch_operands = 0 : i64, tpu.core_type = #tpu.core_type<tc>, window_params = [{transform_indices = @transform_0, window_bounds = array<i64: 16, 256>}, {pipeline_mode = #tpu.pipeline_mode<synchronous>, transform_indices = @transform_1, window_bounds = array<i64: 256, 128>}, {pipeline_mode = #tpu.pipeline_mode<synchronous>, transform_indices = @transform_2, window_bounds = array<i64: 1, 128>}, {transform_indices = @transform_3, window_bounds = array<i64: 16, 128>}]} {
    %c0 = arith.constant 0 : index
    %c0_0 = arith.constant 0 : index
    %0 = vector.load %arg1[%c0, %c0_0] : memref<16x256xbf16, #tpu.memory_space<vmem>>, vector<16x256xbf16>
    %c0_1 = arith.constant 0 : index
    %c0_2 = arith.constant 0 : index
    %1 = vector.load %arg2[%c0_1, %c0_2] : memref<256x128xbf16, #tpu.memory_space<vmem>>, vector<256x128xbf16>
    %cst = arith.constant dense<0.000000e+00> : vector<16x128xf32>
    %2 = tpu.matmul %0, %1, %cst {dimension_numbers = #tpu.dot_dimension_numbers<[1], [0], [0], [1], [0, 0, 1, 1], [], []>} : vector<16x256xbf16>, vector<256x128xbf16>, vector<16x128xf32> -> vector<16x128xf32>
    %c0_3 = arith.constant 0 : index
    %c0_4 = arith.constant 0 : index
    %3 = vector.load %arg3[%c0_3, %c0_4] : memref<1x128xf32, #tpu.memory_space<vmem>>, vector<1x128xf32>
    %4 = vector.broadcast %3 : vector<1x128xf32> to vector<16x128xf32>
    %5 = arith.addf %2, %4 : vector<16x128xf32>
    %c0_5 = arith.constant 0 : index
    %c0_6 = arith.constant 0 : index
    %6 = vector.load %arg4[%c0_5, %c0_6] : memref<16x128xf32, #tpu.memory_space<vmem>>, vector<16x128xf32>
    tpu.vector_store %arg4[%c0_5, %c0_6], %5 {strides = array<i32>} : memref<16x128xf32, #tpu.memory_space<vmem>>, vector<16x128xf32>,
    return
  }
  func.func @transform_0(%arg0: i32) -> (i32, i32) {
    %c0_i32 = arith.constant 0 : i32
    %c0_i32_0 = arith.constant 0 : i32
    return %arg0, %c0_i32 : i32, i32
  }
  func.func @transform_1(%arg0: i32) -> (i32, i32) {
    %c0_i32 = arith.constant 0 : i32
    %c0_i32_0 = arith.constant 0 : i32
    %c0_i32_1 = arith.constant 0 : i32
    return %c0_i32, %c0_i32_0 : i32, i32
  }
  func.func @transform_2(%arg0: i32) -> (i32, i32) {
    %c0_i32 = arith.constant 0 : i32
    %c0_i32_0 = arith.constant 0 : i32
    %c0_i32_1 = arith.constant 0 : i32
    return %c0_i32, %c0_i32_0 : i32, i32
  }
  func.func @transform_3(%arg0: i32) -> (i32, i32) {
    %c0_i32 = arith.constant 0 : i32
    %c0_i32_0 = arith.constant 0 : i32
    return %arg0, %c0_i32 : i32, i32
  }
}

</mosaic_0001>

<llo_original>
// kernel: patch_embed.1
$region0: #{patch_embed.1}
  #allocation0 [shape = 'u32[]', space=smem, size = 0x4, offset = 0x4, fixed_abs, tag = 'smem constant byte address 0x4 - core index']
  #allocation1 [shape = 'u32[144,128]{1,0:T(1,128)}', space=vmem, size = 0x12000, scoped, tag = 'internal scratch']
  %s0 = inlined_call_operand.vmem [shape: bf16[16,256], index: 0, kind: input, shape index: {}]
  %s1 = inlined_call_operand.vmem [shape: bf16[256,128], index: 1, kind: input, shape index: {}]
  %s2 = inlined_call_operand.vmem [shape: f32[1,128], index: 2, kind: input, shape index: {}]
  %s3 = inlined_call_operand.vmem [shape: f32[16,128], index: 3, kind: output, shape index: {}]
  %s4 = sld [smem:[#allocation0]]
  $region22: #{patch_embed.1} parent=0
    _
  %s6 = ssub.s32 1, %s4
  %s7 = scalar_select 0, %s6, %s4
  // Predicated region
  $region2: #{patch_embed.1} parent=0 // pred_check
    _
  $region3: #{patch_embed.1} parent=0 // pred_check_branch
    %9 = sbr.rel (0) target = $region5
  $region4: #{patch_embed.1} parent=0 // pred_region
    _
  $region5: #{patch_embed.1} parent=0 // pred_fallthru
    _
  // Predicated region
  $region6: #{patch_embed.1} parent=0 // pred_check
    _
  $region7: #{patch_embed.1} parent=0 // pred_check_branch
    %11 = sbr.rel (0) target = $region9
  $region8: #{patch_embed.1} parent=0 // pred_region
    _
  $region9: #{patch_embed.1} parent=0 // pred_fallthru
    _
  // Predicated region
  $region10: #{patch_embed.1} parent=0 // pred_check
    _
  $region11: #{patch_embed.1} parent=0 // pred_check_branch
    %13 = sbr.rel (0) target = $region13
  $region12: #{patch_embed.1} parent=0 // pred_region
    _
  $region13: #{patch_embed.1} parent=0 // pred_fallthru
    _
  %v15 = vld [vmem:[%s0] sm:$0xff]
  %v16 = vld [vmem:[%s0 + $0x8] sm:$0xff]
  %v17 = vld [vmem:[%s1] sm:$0xf]
  %v18 = vld [vmem:[%s1 + $0x4] sm:$0xf]
  %v19 = vld [vmem:[%s1 + $0x8] sm:$0xf]
  %v20 = vld [vmem:[%s1 + $0xc] sm:$0xf]
  %v21 = vld [vmem:[%s1 + $0x10] sm:$0xf]
  %v22 = vld [vmem:[%s1 + $0x14] sm:$0xf]
  %v23 = vld [vmem:[%s1 + $0x18] sm:$0xf]
  %v24 = vld [vmem:[%s1 + $0x1c] sm:$0xf]
  %v25 = vld [vmem:[%s1 + $0x20] sm:$0xf]
  %v26 = vld [vmem:[%s1 + $0x24] sm:$0xf]
  %v27 = vld [vmem:[%s1 + $0x28] sm:$0xf]
  %v28 = vld [vmem:[%s1 + $0x2c] sm:$0xf]
  %v29 = vld [vmem:[%s1 + $0x30] sm:$0xf]
  %v30 = vld [vmem:[%s1 + $0x34] sm:$0xf]
  %v31 = vld [vmem:[%s1 + $0x38] sm:$0xf]
  %v32 = vld [vmem:[%s1 + $0x3c] sm:$0xf]
  %v33 = vld [vmem:[%s1 + $0x40] sm:$0xf]
  %v34 = vld [vmem:[%s1 + $0x44] sm:$0xf]
  %v35 = vld [vmem:[%s1 + $0x48] sm:$0xf]
  %v36 = vld [vmem:[%s1 + $0x4c] sm:$0xf]
  %v37 = vld [vmem:[%s1 + $0x50] sm:$0xf]
  %v38 = vld [vmem:[%s1 + $0x54] sm:$0xf]
  %v39 = vld [vmem:[%s1 + $0x58] sm:$0xf]
  %v40 = vld [vmem:[%s1 + $0x5c] sm:$0xf]
  %v41 = vld [vmem:[%s1 + $0x60] sm:$0xf]
  %v42 = vld [vmem:[%s1 + $0x64] sm:$0xf]
  %v43 = vld [vmem:[%s1 + $0x68] sm:$0xf]
  %v44 = vld [vmem:[%s1 + $0x6c] sm:$0xf]
  %v45 = vld [vmem:[%s1 + $0x70] sm:$0xf]
  %v46 = vld [vmem:[%s1 + $0x74] sm:$0xf]
  %v47 = vld [vmem:[%s1 + $0x78] sm:$0xf]
  %v48 = vld [vmem:[%s1 + $0x7c] sm:$0xf]
  %v49 = vld [vmem:[%s2] sm:$0x1]
  %v51 = vlaneseq
  %v52 = vshrl.u32 %v51, 7
  %v53 = vsub.s32 0, %v52
  %v54 = vrot.slane %v49, %v53
  %v58 = vunpack.c.l.b16 %v15
  %v59 = vunpack.c.h.b16 %v15
  %v60 = vunpack.c.l.b16 %v16
  %v61 = vunpack.c.h.b16 %v16
  %v62 = vpack.c.b16 %v60, %v58
  %v63 = vpack.c.b16 %v61, %v59
  %v98 = vunpack.c.l.b16 %v17
  %v99 = vunpack.c.l.b16 %v18
  %v100 = vunpack.c.l.b16 %v19
  %v101 = vunpack.c.l.b16 %v20
  %v102 = vunpack.c.l.b16 %v21
  %v103 = vunpack.c.l.b16 %v22
  %v104 = vunpack.c.l.b16 %v23
  %v105 = vunpack.c.l.b16 %v24
  %v106 = vunpack.c.l.b16 %v25
  %v107 = vunpack.c.l.b16 %v26
  %v108 = vunpack.c.l.b16 %v27
  %v109 = vunpack.c.l.b16 %v28
  %v110 = vunpack.c.l.b16 %v29
  %v111 = vunpack.c.l.b16 %v30
  %v112 = vunpack.c.l.b16 %v31
  %v113 = vunpack.c.l.b16 %v32
  %v114 = vunpack.c.l.b16 %v33
  %v115 = vunpack.c.l.b16 %v34
  %v116 = vunpack.c.l.b16 %v35
  %v117 = vunpack.c.l.b16 %v36
  %v118 = vunpack.c.l.b16 %v37
  %v119 = vunpack.c.l.b16 %v38
  %v120 = vunpack.c.l.b16 %v39
  %v121 = vunpack.c.l.b16 %v40
  %v122 = vunpack.c.l.b16 %v41
  %v123 = vunpack.c.l.b16 %v42
  %v124 = vunpack.c.l.b16 %v43
  %v125 = vunpack.c.l.b16 %v44
  %v126 = vunpack.c.l.b16 %v45
  %v127 = vunpack.c.l.b16 %v46
  %v128 = vunpack.c.l.b16 %v47
  %v129 = vunpack.c.l.b16 %v48
  %v130 = vpack.c.b16 %v99, %v98
  %v131 = vpack.c.b16 %v101, %v100
  %v132 = vpack.c.b16 %v103, %v102
  %v133 = vpack.c.b16 %v105, %v104
  %v134 = vpack.c.b16 %v107, %v106
  %v135 = vpack.c.b16 %v109, %v108
  %v136 = vpack.c.b16 %v111, %v110
  %v137 = vpack.c.b16 %v113, %v112
  %v138 = vpack.c.b16 %v115, %v114
  %v139 = vpack.c.b16 %v117, %v116
  %v140 = vpack.c.b16 %v119, %v118
  %v141 = vpack.c.b16 %v121, %v120
  %v142 = vpack.c.b16 %v123, %v122
  %v143 = vpack.c.b16 %v125, %v124
  %v144 = vpack.c.b16 %v127, %v126
  %v145 = vpack.c.b16 %v129, %v128
  %162 = vmatprep.subr.bf16.mxu0 0
  %163 = vmatpush1.bf16.msra.mxu0 %v130
  %164 = vmatprep.subr.bf16.mxu0 0
  %165 = vmatpush1.bf16.msra.mxu0 %v131
  %166 = vmatprep.subr.bf16.mxu0 0
  %167 = vmatpush1.bf16.msra.mxu0 %v132
  %168 = vmatprep.subr.bf16.mxu0 0
  %169 = vmatpush1.bf16.msra.mxu0 %v133
  %170 = vmatprep.subr.bf16.mxu0 0
  %171 = vmatpush1.bf16.msra.mxu0 %v134
  %172 = vmatprep.subr.bf16.mxu0 0
  %173 = vmatpush1.bf16.msra.mxu0 %v135
  %174 = vmatprep.subr.bf16.mxu0 0
  %175 = vmatpush1.bf16.msra.mxu0 %v136
  %176 = vmatprep.subr.bf16.mxu0 0
  %177 = vmatpush1.bf16.msra.mxu0 %v137
  %178 = vmatprep.subr.bf16.mxu0 0
  %179 = vmatpush1.bf16.msra.mxu0 %v138
  %180 = vmatprep.subr.bf16.mxu0 0
  %181 = vmatpush1.bf16.msra.mxu0 %v139
  %182 = vmatprep.subr.bf16.mxu0 0
  %183 = vmatpush1.bf16.msra.mxu0 %v140
  %184 = vmatprep.subr.bf16.mxu0 0
  %185 = vmatpush1.bf16.msra.mxu0 %v141
  %186 = vmatprep.subr.bf16.mxu0 0
  %187 = vmatpush1.bf16.msra.mxu0 %v142
  %188 = vmatprep.subr.bf16.mxu0 0
  %189 = vmatpush1.bf16.msra.mxu0 %v143
  %190 = vmatprep.subr.bf16.mxu0 0
  %191 = vmatpush1.bf16.msra.mxu0 %v144
  %192 = vmatprep.subr.bf16.mxu0 0
  %193 = vmatpush1.bf16.msra.mxu0 %v145
  %194 = vmatprep.mubr.bf16.mxu0 %v63
  %195 = vmatmul.mubr.bf16.gmra.mrb[0].mxu0 %v62
  %v196 = vpop.f32.mrb[0].mxu0
  %v197 = vadd.f32 %v54, %v196
  %v198 = vpop.f32.mrb[0].mxu0
  %v199 = vpop.f32.mrb[0].mxu0
  %v200 = vadd.f32 %v54, %v199
  %v201 = vpop.f32.mrb[0].mxu0
  %202 = vdwg.mxu0
  %203 = vst [vmem:[%s3] sm:$0xff] %v197
  %204 = vst [vmem:[%s3 + $0x8] sm:$0xff] %v200
  // Predicated region
  $region14: #{patch_embed.1} parent=0 // pred_check
    _
  $region15: #{patch_embed.1} parent=0 // pred_check_branch
    %206 = sbr.rel (0) target = $region17
  $region16: #{patch_embed.1} parent=0 // pred_region
    _
  $region17: #{patch_embed.1} parent=0 // pred_fallthru
    _
  // Predicated region
  $region18: #{patch_embed.1} parent=0 // pred_check
    _
  $region19: #{patch_embed.1} parent=0 // pred_check_branch
    %208 = sbr.rel (0) target = $region21
  $region20: #{patch_embed.1} parent=0 // pred_region
    _
  $region21: #{patch_embed.1} parent=0 // pred_fallthru
    _

</llo_original>
